<compile_context>
chip_gen: v7x
topology: tpu7x:2x2x1
jax: 0.10.0
libtpu: 0.0.40
codegen_flags: <defaults>
</compile_context>

<pallas_src>
import jax
import jax.numpy as jnp
from jax.experimental import pallas as pl
from jax.experimental.pallas import tpu as pltpu


# --------------------------------------------------------------------------- kernel

def _make_kernel(epilogue_dtype):
    edt = epilogue_dtype

    def kernel(x_ref, w1_ref, b1_ref, w2_ref, b2_ref, w3_ref, b3_ref, o_ref):
        cdt = w1_ref.dtype                       # streaming / MXU input dtype (bf16 or f32)
        x = x_ref[...].astype(cdt)               # (3, Bt); no-op if already bf16

        # Layer 1: (32,3) @ (3,Bt) -> (32,Bt), f32 MXU accumulate; bias+ReLU in edt.
        h1 = jnp.dot(w1_ref[...], x, preferred_element_type=jnp.float32)
        h1 = jnp.maximum(h1.astype(edt) + b1_ref[...], 0).astype(cdt)

        # Layer 2: (16,32) @ (32,Bt) -> (16,Bt).
        h2 = jnp.dot(w2_ref[...], h1, preferred_element_type=jnp.float32)
        h2 = jnp.maximum(h2.astype(edt) + b2_ref[...], 0).astype(cdt)

        # Layer 3: (1,16) @ (16,Bt) -> (1,Bt); bias + sigmoid in f32 (EUP slot).
        z = jnp.dot(w3_ref[...], h2, preferred_element_type=jnp.float32)
        z = z + b3_ref[...]
        o_ref[...] = jax.nn.sigmoid(z).astype(o_ref.dtype)

    return kernel


# --------------------------------------------------------------------------- config

def auto_tpu_config():
    """Per-generation (b_tile, vmem_limit_bytes, epilogue_dtype)."""
    try:
        kind = jax.devices()[0].device_kind.lower()
    except Exception:  # pragma: no cover
        kind = ""
    if "v7" in kind:                       # 64 MiB VMEM / TC, 2 TCs, bf16 VALU
        return 65536, 56 * 1024 * 1024, jnp.bfloat16
    if "v6" in kind:                       # 128 MiB VMEM, bf16 VALU
        return 131072, 100 * 1024 * 1024, jnp.bfloat16
    if "v5" in kind:                       # v5e/v5p: 128 MiB VMEM, no bf16 VPU/EUP
        return 131072, 100 * 1024 * 1024, jnp.float32
    # Unknown device: conservative defaults that fit any generation.
    return 32768, 48 * 1024 * 1024, jnp.float32


# --------------------------------------------------------------------------- wrapper

def nnet_forward(x, params, *, features_first=False, b_tile=None,
                 stream_dtype=jnp.bfloat16, epilogue_dtype=None,
                 out_dtype=jnp.float32, vmem_limit_bytes=None):
    """Fused MLP forward.

    x: (B, 3) torch layout, or (3, B) when features_first=True (zero wrapper passes;
       supply bf16 upstream for minimum HBM traffic).
    Returns (B, 1) in out_dtype.  For exact-f32 parity pass stream_dtype=jnp.float32.
    """
    auto_tile, auto_vmem, auto_epi = auto_tpu_config()
    if b_tile is None:
        b_tile = auto_tile
    if vmem_limit_bytes is None:
        vmem_limit_bytes = auto_vmem
    if epilogue_dtype is None:
        epilogue_dtype = auto_epi

    if features_first:
        assert x.ndim == 2 and x.shape[0] == 3, x.shape
        B = x.shape[1]
        xt = x                                   # no wrapper pass; cast happens in-kernel
    else:
        assert x.ndim == 2 and x.shape[1] == 3, x.shape
        B = x.shape[0]
        xt = x.T.astype(stream_dtype)            # single fused transpose+cast pass

    # ---- batch tile selection (no padding; ragged last tile handled by Pallas) ----
    lane = 128
    if B <= lane:
        bt = B                                   # single block == full array dims
    else:
        bt = min(int(b_tile), pl.cdiv(B, lane) * lane)
        if B >= 2 * lane:                        # >=2 grid steps -> v7x dual-TC sharding
            bt = min(bt, pl.cdiv(pl.cdiv(B, 2), lane) * lane)
        bt = max(bt, lane)
    grid = (pl.cdiv(B, bt),)

    # ---- parameters (torch layout: W (out,in), b (out,)) ----
    w1, w2, w3 = params["w1"], params["w2"], params["w3"]
    b1, b2, b3 = (params[k].reshape(-1, 1) for k in ("b1", "b2", "b3"))
    w1s, w2s, w3s = (w.astype(stream_dtype) for w in (w1, w2, w3))
    b1e = b1.astype(epilogue_dtype)
    b2e = b2.astype(epilogue_dtype)
    b3f = b3.astype(jnp.float32)

    args = (xt, w1s, b1e, w2s, b2e, w3s, b3f)
    flops = int(2 * B * (3 * 32 + 32 * 16 + 16 * 1))
    bytes_accessed = int(sum(a.size * a.dtype.itemsize for a in args)
                         + B * jnp.dtype(out_dtype).itemsize)

    resident = lambda a: pl.BlockSpec(a.shape, lambda i: (0, 0))  # DMA'd once, VMEM-resident

    out = pl.pallas_call(
        _make_kernel(epilogue_dtype),
        out_shape=jax.ShapeDtypeStruct((1, B), out_dtype),
        grid=grid,
        in_specs=[
            pl.BlockSpec((3, bt), lambda i: (0, i)),   # x tile, batch on lanes
            resident(w1s), resident(b1e),
            resident(w2s), resident(b2e),
            resident(w3s), resident(b3f),
        ],
        out_specs=pl.BlockSpec((1, bt), lambda i: (0, i)),        # lane-dense output
        compiler_params=pltpu.CompilerParams(
            dimension_semantics=("parallel",),
            vmem_limit_bytes=int(vmem_limit_bytes)),
        cost_estimate=pl.CostEstimate(
            flops=flops, transcendentals=int(B), bytes_accessed=bytes_accessed),
    )(*args)

    return out.reshape(B, 1)   # (1,B) -> (B,1): metadata-only, no extra HBM pass


# --------------------------------------------------------------------------- init / reference

def init_params(key):
    """Torch-style init: W (out,in), b (out,1), U[-1/sqrt(fan_in), +1/sqrt(fan_in)]."""
    def linear(key, fan_in, fan_out):
        kw, kb = jax.random.split(key)
        bound = 1.0 / jnp.sqrt(fan_in)
        w = jax.random.uniform(kw, (fan_out, fan_in), jnp.float32, -bound, bound)
        b = jax.random.uniform(kb, (fan_out, 1), jnp.float32, -bound, bound)
        return w, b

    k1, k2, k3 = jax.random.split(key, 3)
    w1, b1 = linear(k1, 3, 32)
    w2, b2 = linear(k2, 32, 16)
    w3, b3 = linear(k3, 16, 1)
    return {"w1": w1, "b1": b1, "w2": w2, "b2": b2, "w3": w3, "b3": b3}


def nnet_reference(x, params, *, stream_dtype=jnp.bfloat16, epilogue_dtype=jnp.float32):
    """Pure-JAX reference mirroring the kernel's stream/epilogue dtypes.  x: (B, 3)."""
    cdt, edt = stream_dtype, epilogue_dtype
    w1 = params["w1"].astype(cdt)
    w2 = params["w2"].astype(cdt)
    w3 = params["w3"].astype(cdt)
    b1 = params["b1"].reshape(-1, 1).astype(edt)
    b2 = params["b2"].reshape(-1, 1).astype(edt)
    b3 = params["b3"].reshape(-1, 1).astype(jnp.float32)

    xt = x.T.astype(cdt)
    h1 = jnp.dot(w1, xt, preferred_element_type=jnp.float32)
    h1 = jnp.maximum(h1.astype(edt) + b1, 0).astype(cdt)
    h2 = jnp.dot(w2, h1, preferred_element_type=jnp.float32)
    h2 = jnp.maximum(h2.astype(edt) + b2, 0).astype(cdt)
    z = jnp.dot(w3, h2, preferred_element_type=jnp.float32) + b3
    return jax.nn.sigmoid(z).T   # (B, 1)


# --------------------------------------------------------------------------- demo

if __name__ == "__main__":
    key = jax.random.PRNGKey(0)
    kp, kx1, kx2 = jax.random.split(key, 3)
    params = init_params(kp)
    _, _, epi = auto_tpu_config()   # use the same epilogue dtype in kernel and reference

    # Case 1: tiny batch (single lane-partial block with full-dim tile).
    B1 = 8
    x1 = jax.random.normal(kx1, (B1, 3), jnp.float32)
    y1 = jax.block_until_ready(nnet_forward(x1, params, epilogue_dtype=epi))
    r1 = nnet_reference(x1, params, epilogue_dtype=epi)
    assert y1.shape == (B1, 1), y1.shape
    assert jnp.allclose(y1, r1, atol=1e-3, rtol=1e-3), (y1, r1)

    # Case 2: ragged multi-tile batch (cdiv grid + masked writeback on the last tile).
    B2 = 300
    x2 = jax.random.normal(kx2, (B2, 3), jnp.float32)
    y2 = jax.block_until_ready(nnet_forward(x2, params, epilogue_dtype=epi))
    r2 = nnet_reference(x2, params, epilogue_dtype=epi)
    assert y2.shape == (B2, 1), y2.shape
    assert jnp.allclose(y2, r2, atol=1e-3, rtol=1e-3), (y2, r2)

    # Case 3: features-first (3, B) input -> no wrapper transpose/pad pass at all.
    y2_ff = jax.block_until_ready(
        nnet_forward(x2.T, params, features_first=True, epilogue_dtype=epi))
    assert jnp.allclose(y2_ff, y2, atol=1e-3, rtol=1e-3), (y2_ff, y2)

    print("KERNEL_OK")
</pallas_src>

<mosaic_0001>
module attributes {stable_mosaic.version = 11 : i64} {
  func.func @kernel(%arg0: i32, %arg1: memref<3x8xbf16, #tpu.memory_space<vmem>>, %arg2: memref<32x3xbf16, #tpu.memory_space<vmem>>, %arg3: memref<32x1xf32, #tpu.memory_space<vmem>>, %arg4: memref<16x32xbf16, #tpu.memory_space<vmem>>, %arg5: memref<16x1xf32, #tpu.memory_space<vmem>>, %arg6: memref<1x16xbf16, #tpu.memory_space<vmem>>, %arg7: memref<1x1xf32, #tpu.memory_space<vmem>>, %arg8: memref<1x8xf32, #tpu.memory_space<vmem>>) attributes {dimension_semantics = [#tpu.dimension_semantics<parallel>], iteration_bounds = array<i64: 1>, scalar_prefetch = 0 : i64, scratch_operands = 0 : i64, tpu.core_type = #tpu.core_type<tc>, window_params = [{transform_indices = @transform_0, window_bounds = array<i64: 3, 8>}, {pipeline_mode = #tpu.pipeline_mode<synchronous>, transform_indices = @transform_1, window_bounds = array<i64: 32, 3>}, {pipeline_mode = #tpu.pipeline_mode<synchronous>, transform_indices = @transform_2, window_bounds = array<i64: 32, 1>}, {pipeline_mode = #tpu.pipeline_mode<synchronous>, transform_indices = @transform_3, window_bounds = array<i64: 16, 32>}, {pipeline_mode = #tpu.pipeline_mode<synchronous>, transform_indices = @transform_4, window_bounds = array<i64: 16, 1>}, {pipeline_mode = #tpu.pipeline_mode<synchronous>, transform_indices = @transform_5, window_bounds = array<i64: 1, 16>}, {pipeline_mode = #tpu.pipeline_mode<synchronous>, transform_indices = @transform_6, window_bounds = array<i64: 1, 1>}, {transform_indices = @transform_7, window_bounds = array<i64: 1, 8>}]} {
    %c0 = arith.constant 0 : index
    %c0_0 = arith.constant 0 : index
    %0 = vector.load %arg1[%c0, %c0_0] : memref<3x8xbf16, #tpu.memory_space<vmem>>, vector<3x8xbf16>
    %c0_1 = arith.constant 0 : index
    %c0_2 = arith.constant 0 : index
    %1 = vector.load %arg2[%c0_1, %c0_2] : memref<32x3xbf16, #tpu.memory_space<vmem>>, vector<32x3xbf16>
    %cst = arith.constant dense<0.000000e+00> : vector<32x8xf32>
    %2 = tpu.matmul %1, %0, %cst {dimension_numbers = #tpu.dot_dimension_numbers<[1], [0], [0], [1], [0, 0, 1, 1], [], []>} : vector<32x3xbf16>, vector<3x8xbf16>, vector<32x8xf32> -> vector<32x8xf32>
    %c0_3 = arith.constant 0 : index
    %c0_4 = arith.constant 0 : index
    %3 = vector.load %arg3[%c0_3, %c0_4] : memref<32x1xf32, #tpu.memory_space<vmem>>, vector<32x1xf32>
    %4 = vector.broadcast %3 : vector<32x1xf32> to vector<32x8xf32>
    %5 = arith.addf %2, %4 : vector<32x8xf32>
    %cst_5 = arith.constant 0.000000e+00 : f32
    %6 = vector.broadcast %cst_5 : f32 to vector<32x8xf32>
    %7 = arith.maximumf %5, %6 : vector<32x8xf32>
    %8 = arith.truncf %7 : vector<32x8xf32> to vector<32x8xbf16>
    %c0_6 = arith.constant 0 : index
    %c0_7 = arith.constant 0 : index
    %9 = vector.load %arg4[%c0_6, %c0_7] : memref<16x32xbf16, #tpu.memory_space<vmem>>, vector<16x32xbf16>
    %cst_8 = arith.constant dense<0.000000e+00> : vector<16x8xf32>
    %10 = tpu.matmul %9, %8, %cst_8 {dimension_numbers = #tpu.dot_dimension_numbers<[1], [0], [0], [1], [0, 0, 1, 1], [], []>} : vector<16x32xbf16>, vector<32x8xbf16>, vector<16x8xf32> -> vector<16x8xf32>
    %c0_9 = arith.constant 0 : index
    %c0_10 = arith.constant 0 : index
    %11 = vector.load %arg5[%c0_9, %c0_10] : memref<16x1xf32, #tpu.memory_space<vmem>>, vector<16x1xf32>
    %12 = vector.broadcast %11 : vector<16x1xf32> to vector<16x8xf32>
    %13 = arith.addf %10, %12 : vector<16x8xf32>
    %cst_11 = arith.constant 0.000000e+00 : f32
    %14 = vector.broadcast %cst_11 : f32 to vector<16x8xf32>
    %15 = arith.maximumf %13, %14 : vector<16x8xf32>
    %16 = arith.truncf %15 : vector<16x8xf32> to vector<16x8xbf16>
    %c0_12 = arith.constant 0 : index
    %c0_13 = arith.constant 0 : index
    %17 = vector.load %arg6[%c0_12, %c0_13] : memref<1x16xbf16, #tpu.memory_space<vmem>>, vector<1x16xbf16>
    %cst_14 = arith.constant dense<0.000000e+00> : vector<1x8xf32>
    %18 = tpu.matmul %17, %16, %cst_14 {dimension_numbers = #tpu.dot_dimension_numbers<[1], [0], [0], [1], [0, 0, 1, 1], [], []>} : vector<1x16xbf16>, vector<16x8xbf16>, vector<1x8xf32> -> vector<1x8xf32>
    %c0_15 = arith.constant 0 : index
    %c0_16 = arith.constant 0 : index
    %19 = vector.load %arg7[%c0_15, %c0_16] : memref<1x1xf32, #tpu.memory_space<vmem>>, vector<1x1xf32>
    %20 = vector.broadcast %19 : vector<1x1xf32> to vector<1x8xf32>
    %21 = arith.addf %18, %20 : vector<1x8xf32>
    %22 = arith.negf %21 : vector<1x8xf32>
    %23 = math.exp %22 : vector<1x8xf32>
    %cst_17 = arith.constant 1.000000e+00 : f32
    %24 = vector.broadcast %cst_17 : f32 to vector<1x8xf32>
    %25 = arith.addf %24, %23 : vector<1x8xf32>
    %26 = arith.divf %24, %25 : vector<1x8xf32>
    %c0_18 = arith.constant 0 : index
    %c0_19 = arith.constant 0 : index
    %27 = vector.load %arg8[%c0_18, %c0_19] : memref<1x8xf32, #tpu.memory_space<vmem>>, vector<1x8xf32>
    tpu.vector_store %arg8[%c0_18, %c0_19], %26 {strides = array<i32>} : memref<1x8xf32, #tpu.memory_space<vmem>>, vector<1x8xf32>,
    return
  }
  func.func @transform_0(%arg0: i32) -> (i32, i32) {
    %c0_i32 = arith.constant 0 : i32
    %c0_i32_0 = arith.constant 0 : i32
    return %c0_i32, %arg0 : i32, i32
  }
  func.func @transform_1(%arg0: i32) -> (i32, i32) {
    %c0_i32 = arith.constant 0 : i32
    %c0_i32_0 = arith.constant 0 : i32
    %c0_i32_1 = arith.constant 0 : i32
    return %c0_i32, %c0_i32_0 : i32, i32
  }
  func.func @transform_2(%arg0: i32) -> (i32, i32) {
    %c0_i32 = arith.constant 0 : i32
    %c0_i32_0 = arith.constant 0 : i32
    %c0_i32_1 = arith.constant 0 : i32
    return %c0_i32, %c0_i32_0 : i32, i32
  }
  func.func @transform_3(%arg0: i32) -> (i32, i32) {
    %c0_i32 = arith.constant 0 : i32
    %c0_i32_0 = arith.constant 0 : i32
    %c0_i32_1 = arith.constant 0 : i32
    return %c0_i32, %c0_i32_0 : i32, i32
  }
  func.func @transform_4(%arg0: i32) -> (i32, i32) {
    %c0_i32 = arith.constant 0 : i32
    %c0_i32_0 = arith.constant 0 : i32
    %c0_i32_1 = arith.constant 0 : i32
    return %c0_i32, %c0_i32_0 : i32, i32
  }
  func.func @transform_5(%arg0: i32) -> (i32, i32) {
    %c0_i32 = arith.constant 0 : i32
    %c0_i32_0 = arith.constant 0 : i32
    %c0_i32_1 = arith.constant 0 : i32
    return %c0_i32, %c0_i32_0 : i32, i32
  }
  func.func @transform_6(%arg0: i32) -> (i32, i32) {
    %c0_i32 = arith.constant 0 : i32
    %c0_i32_0 = arith.constant 0 : i32
    %c0_i32_1 = arith.constant 0 : i32
    return %c0_i32, %c0_i32_0 : i32, i32
  }
  func.func @transform_7(%arg0: i32) -> (i32, i32) {
    %c0_i32 = arith.constant 0 : i32
    %c0_i32_0 = arith.constant 0 : i32
    return %c0_i32, %arg0 : i32, i32
  }
}

</mosaic_0001>

<llo_original>
// kernel: tpu_custom_call.1
$region0: #{tpu_custom_call.1}
  #allocation0 [shape = 'u32[]', space=smem, size = 0x4, offset = 0x4, fixed_abs, tag = 'smem constant byte address 0x4 - core index']
  #allocation1 [shape = 'u32[144,128]{1,0:T(1,128)}', space=vmem, size = 0x12000, scoped, tag = 'internal scratch']
  #allocation2 [shape = 'f32[1,1]{1,0:T(1,128)S(1)}', space=vmem, size = 0x200, scoped, tag = 'scoped memory for tpu_custom_call.1']
  %s0 = inlined_call_operand.vmem [shape: bf16[3,8], index: 0, kind: input, shape index: {}]
  %s1 = inlined_call_operand.vmem [shape: bf16[32,3], index: 1, kind: input, shape index: {}]
  %s2 = inlined_call_operand.vmem [shape: f32[32,1], index: 2, kind: input, shape index: {}]
  %s3 = inlined_call_operand.vmem [shape: bf16[16,32], index: 3, kind: input, shape index: {}]
  %s4 = inlined_call_operand.vmem [shape: f32[16,1], index: 4, kind: input, shape index: {}]
  %s5 = inlined_call_operand.vmem [shape: bf16[1,16], index: 5, kind: input, shape index: {}]
  %s6 = inlined_call_operand.<no memory space> [shape: f32[1,1], index: 6, kind: input, shape index: {}]
  %s7 = inlined_call_operand.hbm [shape: f32[1,8], index: 7, kind: output, shape index: {}]
  %s8 = sld [smem:[#allocation0]]
  $region38: #{tpu_custom_call.1} parent=0
    _
  %s10 = ssub.s32 1, %s8
  %s11 = scalar_select 0, %s10, %s8
  %v12 = vstv %s6
  %13 = vst [vmem:[#allocation2] sm:$0x1] %v12
  $region1: #{tpu_custom_call.1} parent=0
    #allocation3 [shape = 'u8[512]{0}', space=vmem, size = 0x400, scoped, tag = 'output window, operand 0, single buffered']
    #allocation4 [shape = 's32[1]{0}', space=sflag, size = 0x4, scoped, tag = 'scoped memory for tpu_custom_call.1']
    %14 = vsyncpa [#allocation4], 0
    // Predicated region
    $region2: #{tpu_custom_call.1} parent=1 // pred_check
      _
    $region3: #{tpu_custom_call.1} parent=1 // pred_check_branch
      %16 = sbr.rel (0) target = $region5
    $region4: #{tpu_custom_call.1} parent=1 // pred_region
      _
    $region5: #{tpu_custom_call.1} parent=1 // pred_fallthru
      _
    // Predicated region
    $region6: #{tpu_custom_call.1} parent=1 // pred_check
      _
    $region7: #{tpu_custom_call.1} parent=1 // pred_check_branch
      %18 = sbr.rel (0) target = $region9
    $region8: #{tpu_custom_call.1} parent=1 // pred_region
      _
    $region9: #{tpu_custom_call.1} parent=1 // pred_fallthru
      _
    // Predicated region
    $region10: #{tpu_custom_call.1} parent=1 // pred_check
      _
    $region11: #{tpu_custom_call.1} parent=1 // pred_check_branch
      %20 = sbr.rel (0) target = $region13
    $region12: #{tpu_custom_call.1} parent=1 // pred_region
      _
    $region13: #{tpu_custom_call.1} parent=1 // pred_fallthru
      _
    // Predicated region
    $region14: #{tpu_custom_call.1} parent=1 // pred_check
      _
    $region15: #{tpu_custom_call.1} parent=1 // pred_check_branch
      %22 = sbr.rel (0) target = $region17
    $region16: #{tpu_custom_call.1} parent=1 // pred_region
      _
    $region17: #{tpu_custom_call.1} parent=1 // pred_fallthru
      _
    // Predicated region
    $region18: #{tpu_custom_call.1} parent=1 // pred_check
      _
    $region19: #{tpu_custom_call.1} parent=1 // pred_check_branch
      %24 = sbr.rel (0) target = $region21
    $region20: #{tpu_custom_call.1} parent=1 // pred_region
      _
    $region21: #{tpu_custom_call.1} parent=1 // pred_fallthru
      _
    // Predicated region
    $region22: #{tpu_custom_call.1} parent=1 // pred_check
      _
    $region23: #{tpu_custom_call.1} parent=1 // pred_check_branch
      %26 = sbr.rel (0) target = $region25
    $region24: #{tpu_custom_call.1} parent=1 // pred_region
      _
    $region25: #{tpu_custom_call.1} parent=1 // pred_fallthru
      _
    // Predicated region
    $region26: #{tpu_custom_call.1} parent=1 // pred_check
      _
    $region27: #{tpu_custom_call.1} parent=1 // pred_check_branch
      %28 = sbr.rel (0) target = $region29
    $region28: #{tpu_custom_call.1} parent=1 // pred_region
      _
    $region29: #{tpu_custom_call.1} parent=1 // pred_fallthru
      _
    %v30 = vld [vmem:[%s0] sm:$0x3]
    %v31 = vld [vmem:[%s1] sm:$0xf]
    %v32 = vld [vmem:[%s1 + $0x4] sm:$0xf]
    %v33 = vld [vmem:[%s1 + $0x8] sm:$0xf]
    %v34 = vld [vmem:[%s1 + $0xc] sm:$0xf]
    %v35 = vld [vmem:[%s2] sm:$0xff]
    %v36 = vld [vmem:[%s2 + $0x8] sm:$0xff]
    %v37 = vld [vmem:[%s2 + $0x10] sm:$0xff]
    %v38 = vld [vmem:[%s2 + $0x18] sm:$0xff]
    %40 = vset.pattern.permute.xlu0 0
    %41 = vperm.xlu0 %40, %v35
    %v42 = vpop.permute.xlu0 %41
    %45 = vset.pattern.permute.xlu0 0
    %46 = vperm.xlu0 %45, %v36
    %v47 = vpop.permute.xlu0 %46
    %50 = vset.pattern.permute.xlu0 0
    %51 = vperm.xlu0 %50, %v37
    %v52 = vpop.permute.xlu0 %51
    %55 = vset.pattern.permute.xlu0 0
    %56 = vperm.xlu0 %55, %v38
    %v57 = vpop.permute.xlu0 %56
    %v63 = vunpack.c.l.b16 %v31
    %v64 = vunpack.c.l.b16 %v32
    %v65 = vunpack.c.l.b16 %v33
    %v66 = vunpack.c.l.b16 %v34
    %v67 = vpack.c.b16 %v64, %v63
    %v68 = vpack.c.b16 %v66, %v65
    %vm69 = vcmask 23552
    %v71 = vsel %vm69, %v67, 0
    %v74 = vsel %vm69, %v68, 0
    %vm76 = vcmask 1040384
    %vm77 = vcmask 1041408
    %v78 = vsel %vm76, 4294967295, 65535
    %v79 = vsel %vm77, %v78, 0
    %v81 = vand.u32 %v30, %v79
    %83 = vmatprep.subr.bf16.mxu0 0
    %84 = vmatpush1.bf16.msra.mxu0 %v81
    %85 = vmatprep.subr.bf16.mxu0 0
    %86 = vmatpush1.bf16.msra.mxu0 0
    %87 = vmatprep.subr.bf16.mxu0 0
    %88 = vmatpush1.bf16.msra.mxu0 0
    %89 = vmatprep.subr.bf16.mxu0 0
    %90 = vmatpush1.bf16.msra.mxu0 0
    %91 = vmatprep.subr.bf16.mxu0 0
    %92 = vmatpush1.bf16.msra.mxu0 0
    %93 = vmatprep.subr.bf16.mxu0 0
    %94 = vmatpush1.bf16.msra.mxu0 0
    %95 = vmatprep.subr.bf16.mxu0 0
    %96 = vmatpush1.bf16.msra.mxu0 0
    %97 = vmatprep.subr.bf16.mxu0 0
    %98 = vmatpush1.bf16.msra.mxu0 0
    %99 = vmatprep.subr.bf16.mxu0 0
    %100 = vmatpush1.bf16.msra.mxu0 0
    %101 = vmatprep.subr.bf16.mxu0 0
    %102 = vmatpush1.bf16.msra.mxu0 0
    %103 = vmatprep.subr.bf16.mxu0 0
    %104 = vmatpush1.bf16.msra.mxu0 0
    %105 = vmatprep.subr.bf16.mxu0 0
    %106 = vmatpush1.bf16.msra.mxu0 0
    %107 = vmatprep.subr.bf16.mxu0 0
    %108 = vmatpush1.bf16.msra.mxu0 0
    %109 = vmatprep.subr.bf16.mxu0 0
    %110 = vmatpush1.bf16.msra.mxu0 0
    %111 = vmatprep.subr.bf16.mxu0 0
    %112 = vmatpush1.bf16.msra.mxu0 0
    %113 = vmatprep.subr.bf16.mxu0 0
    %114 = vmatpush1.bf16.msra.mxu0 0
    %115 = vmatprep.mubr.bf16.mxu0 0
    %116 = vmatmul.mubr.bf16.gmra.mrb[0].mxu0 %v71
    %v117 = vpop.f32.mrb[0].mxu0
    %v118 = vadd.f32 %v42, %v117
    %v119 = vpop.f32.mrb[0].mxu0
    %v120 = vpop.f32.mrb[0].mxu0
    %v121 = vadd.f32 %v47, %v120
    %v122 = vpop.f32.mrb[0].mxu0
    %123 = vmatprep.mubr.bf16.mxu0 0
    %124 = vmatmul.mubr.bf16.gmra.mrb[0].mxu0 %v74
    %v125 = vpop.f32.mrb[0].mxu0
    %v126 = vadd.f32 %v52, %v125
    %v127 = vpop.f32.mrb[0].mxu0
    %v128 = vpop.f32.mrb[0].mxu0
    %v129 = vadd.f32 %v57, %v128
    %v130 = vpop.f32.mrb[0].mxu0
    %131 = vdwg.mxu0
    %v132 = vmax.f32 %v118, 0.0
    %v133 = vmax.f32 %v121, 0.0
    %v134 = vmax.f32 %v126, 0.0
    %v135 = vmax.f32 %v129, 0.0
    %v136 = vpack.c.bf16 %v133, %v132
    %v137 = vpack.c.bf16 %v135, %v134
    %v138 = vld [vmem:[%s3] sm:$0xf]
    %v139 = vld [vmem:[%s3 + $0x4] sm:$0xf]
    %v140 = vld [vmem:[%s4] sm:$0xff]
    %v141 = vld [vmem:[%s4 + $0x8] sm:$0xff]
    %143 = vset.pattern.permute.xlu0 0
    %144 = vperm.xlu0 %143, %v140
    %v145 = vpop.permute.xlu0 %144
    %148 = vset.pattern.permute.xlu0 0
    %149 = vperm.xlu0 %148, %v141
    %v150 = vpop.permute.xlu0 %149
    %v154 = vunpack.c.l.b16 %v138
    %v155 = vunpack.c.l.b16 %v139
    %v156 = vpack.c.b16 %v155, %v154
    %vm157 = vcmask 261120
    %v159 = vsel %vm157, %v156, 0
    %161 = vmatprep.subr.bf16.mxu0 0
    %162 = vmatpush1.bf16.msra.mxu0 %v136
    %163 = vmatprep.subr.bf16.mxu0 0
    %164 = vmatpush1.bf16.msra.mxu0 %v137
    %165 = vmatprep.subr.bf16.mxu0 0
    %166 = vmatpush1.bf16.msra.mxu0 0
    %167 = vmatprep.subr.bf16.mxu0 0
    %168 = vmatpush1.bf16.msra.mxu0 0
    %169 = vmatprep.subr.bf16.mxu0 0
    %170 = vmatpush1.bf16.msra.mxu0 0
    %171 = vmatprep.subr.bf16.mxu0 0
    %172 = vmatpush1.bf16.msra.mxu0 0
    %173 = vmatprep.subr.bf16.mxu0 0
    %174 = vmatpush1.bf16.msra.mxu0 0
    %175 = vmatprep.subr.bf16.mxu0 0
    %176 = vmatpush1.bf16.msra.mxu0 0
    %177 = vmatprep.subr.bf16.mxu0 0
    %178 = vmatpush1.bf16.msra.mxu0 0
    %179 = vmatprep.subr.bf16.mxu0 0
    %180 = vmatpush1.bf16.msra.mxu0 0
    %181 = vmatprep.subr.bf16.mxu0 0
    %182 = vmatpush1.bf16.msra.mxu0 0
    %183 = vmatprep.subr.bf16.mxu0 0
    %184 = vmatpush1.bf16.msra.mxu0 0
    %185 = vmatprep.subr.bf16.mxu0 0
    %186 = vmatpush1.bf16.msra.mxu0 0
    %187 = vmatprep.subr.bf16.mxu0 0
    %188 = vmatpush1.bf16.msra.mxu0 0
    %189 = vmatprep.subr.bf16.mxu0 0
    %190 = vmatpush1.bf16.msra.mxu0 0
    %191 = vmatprep.subr.bf16.mxu0 0
    %192 = vmatpush1.bf16.msra.mxu0 0
    %193 = vmatprep.mubr.bf16.mxu0 0
    %194 = vmatmul.mubr.bf16.gmra.mrb[0].mxu0 %v159
    %v195 = vpop.f32.mrb[0].mxu0
    %v196 = vadd.f32 %v145, %v195
    %v197 = vpop.f32.mrb[0].mxu0
    %v198 = vpop.f32.mrb[0].mxu0
    %v199 = vadd.f32 %v150, %v198
    %v200 = vpop.f32.mrb[0].mxu0
    %201 = vdwg.mxu0
    %v202 = vmax.f32 %v196, 0.0
    %v203 = vmax.f32 %v199, 0.0
    %v204 = vpack.c.bf16 %v203, %v202
    %v205 = vld [vmem:[%s5] sm:$0x1]
    %v206 = vld [vmem:[#allocation2] sm:$0x1]
    %208 = vset.pattern.permute.xlu0 0
    %209 = vperm.xlu0 %208, %v206
    %v210 = vpop.permute.xlu0 %209
    %v212 = vlaneseq
    %v213 = vshrl.u32 %v212, 7
    %v214 = vsub.s32 0, %v213
    %v215 = vrot.slane %v210, %v214
    %vm216 = vcmask 130048
    %v218 = vsel %vm216, %v205, 0
    %220 = vmatprep.subr.bf16.mxu0 0
    %221 = vmatpush1.bf16.msra.mxu0 %v204
    %222 = vmatprep.subr.bf16.mxu0 0
    %223 = vmatpush1.bf16.msra.mxu0 0
    %224 = vmatprep.subr.bf16.mxu0 0
    %225 = vmatpush1.bf16.msra.mxu0 0
    %226 = vmatprep.subr.bf16.mxu0 0
    %227 = vmatpush1.bf16.msra.mxu0 0
    %228 = vmatprep.subr.bf16.mxu0 0
    %229 = vmatpush1.bf16.msra.mxu0 0
    %230 = vmatprep.subr.bf16.mxu0 0
    %231 = vmatpush1.bf16.msra.mxu0 0
    %232 = vmatprep.subr.bf16.mxu0 0
    %233 = vmatpush1.bf16.msra.mxu0 0
    %234 = vmatprep.subr.bf16.mxu0 0
    %235 = vmatpush1.bf16.msra.mxu0 0
    %236 = vmatprep.subr.bf16.mxu0 0
    %237 = vmatpush1.bf16.msra.mxu0 0
    %238 = vmatprep.subr.bf16.mxu0 0
    %239 = vmatpush1.bf16.msra.mxu0 0
    %240 = vmatprep.subr.bf16.mxu0 0
    %241 = vmatpush1.bf16.msra.mxu0 0
    %242 = vmatprep.subr.bf16.mxu0 0
    %243 = vmatpush1.bf16.msra.mxu0 0
    %244 = vmatprep.subr.bf16.mxu0 0
    %245 = vmatpush1.bf16.msra.mxu0 0
    %246 = vmatprep.subr.bf16.mxu0 0
    %247 = vmatpush1.bf16.msra.mxu0 0
    %248 = vmatprep.subr.bf16.mxu0 0
    %249 = vmatpush1.bf16.msra.mxu0 0
    %250 = vmatprep.subr.bf16.mxu0 0
    %251 = vmatpush1.bf16.msra.mxu0 0
    %252 = vmatprep.mubr.bf16.mxu0 0
    %253 = vmatmul.mubr.bf16.gmra.mrb[0].mxu0 %v218
    %v254 = vpop.f32.mrb[0].mxu0
    %v255 = vadd.f32 %v215, %v254
    %v256 = vpop.f32.mrb[0].mxu0
    %v257 = vpop.f32.mrb[0].mxu0
    %v258 = vpop.f32.mrb[0].mxu0
    %259 = vdwg.mxu0
    %v260 = vxor.u32 %v255, 2147483648
    %v261 = vmul.f32 %v260, 1.442695
    %v262 = vpow.pop %v261
    %v263 = vadd.f32 %v262, 1.0
    %v264 = vrcp.pop %v263
    %v265 = vmul.f32 1.0, %v264
    %vm266 = vcmask 57344
    %267 = vst.msk [vmem:[#allocation3] sm:$0x1] %vm266, %v265
    // Predicated region
    $region30: #{tpu_custom_call.1} parent=1 // pred_check
      _
    $region31: #{tpu_custom_call.1} parent=1 // pred_check_branch
      %269 = sbr.rel (0) target = $region33
    $region32: #{tpu_custom_call.1} parent=1 // pred_region
      %s271 = ssub.s32 16, 16
      %272 = vsyncadd [#allocation4], %s271
      %s274 = sshll.u32 [#allocation3], 4
      %s275 = int_to_ptr.vmem [resolvable:$true] %s274
      %277 = dma.vmem_to_hbm [thread:$0]  %s275, 16, %s7, [#allocation4]
    $region33: #{tpu_custom_call.1} parent=1 // pred_fallthru
      _
    // Predicated region
    $region34: #{tpu_custom_call.1} parent=1 // pred_check
      _
    $region35: #{tpu_custom_call.1} parent=1 // pred_check_branch
      %279 = sbr.rel (0) target = $region37
    $region36: #{tpu_custom_call.1} parent=1 // pred_region
      %280 = dma.done [#allocation4], 16
    $region37: #{tpu_custom_call.1} parent=1 // pred_fallthru
      _
    %281 = vsyncpa [#allocation4], 1

</llo_original>
